<compile_context>
chip_gen: v5e
topology: v5e:2x2
jax: 0.10.0
libtpu: 0.0.40
codegen_flags: <defaults>
</compile_context>

<pallas_src>
import jax
import jax.numpy as jnp
from jax.experimental import pallas as pl
from jax.experimental.pallas import tpu as pltpu


def custom_embedding_kernel(packed_ref, pos_ref, affine_ref, table_ref, out_ref):
    packed = packed_ref[0]                       # (tile_s, 3) f32: [token, weekday, hour+7]
    tile_s = packed.shape[0]
    W = table_ref.shape[0]                       # 128, S-independent

    seq = packed[:, 0:1]                         # (tile_s, 1) raw token scalar value
    wd = packed[:, 1:2].astype(jnp.int32)        # weekday index   -> table rows [0, 7)
    hr = packed[:, 2:3].astype(jnp.int32)        # hour index + 7  -> table rows [7, 31)

    w_eff = affine_ref[0:1, :]                   # (1, d_model)
    b_eff = affine_ref[1:2, :]
    gamma = affine_ref[2:3, :]
    beta = affine_ref[3:4, :]

    # --- fused TokenEmbedding + linear_layer: rank-1 affine (pure VPU) ---
    x = seq * w_eff + b_eff                      # (tile_s, d_model)

    # --- weekday + hour embeddings in ONE "two-hot" matmul, fixed K = 128 ---
    lanes = jax.lax.broadcasted_iota(jnp.int32, (tile_s, W), 1)
    hot = ((lanes == wd) | (lanes == hr)).astype(jnp.float32)
    x = x + jnp.dot(hot, table_ref[...], preferred_element_type=jnp.float32)

    # --- positional embedding: DMA-pipelined stream, plain VPU add ---
    x = x + pos_ref[...]

    # --- LayerNorm over d_model (two-pass variance for numerical safety) ---
    mean = jnp.mean(x, axis=-1, keepdims=True)
    xc = x - mean
    var = jnp.mean(xc * xc, axis=-1, keepdims=True)
    xn = xc * jax.lax.rsqrt(var + 1e-5)
    out_ref[0] = (xn * gamma + beta).astype(out_ref.dtype)


def make_sinusoidal_table(seq_len, d_model):
    pos = jnp.arange(seq_len, dtype=jnp.float32)[:, None]                # (S,1)
    i = jnp.arange(d_model, dtype=jnp.float32)[None, :]                  # (1,D)
    angle_rates = jnp.power(10000.0, -(2.0 * jnp.floor(i / 2.0)) / d_model)
    angles = pos * angle_rates
    even = (jnp.arange(d_model) % 2 == 0)
    return jnp.where(even[None, :], jnp.sin(angles), jnp.cos(angles)).astype(jnp.float32)


def _pick_tile_s(B, S):
    """Biggest tile that keeps per-step HBM traffic large, grid >= 2 for v7x megacore."""
    kind = ""
    try:
        kind = jax.devices()[0].device_kind
    except Exception:
        pass
    cap = 2048 if "v7" in kind.lower() else 1024
    tile_s = S if S <= cap else cap
    if B * pl.cdiv(S, tile_s) < 2 and S >= 16:
        # split so both v7x TensorCores get at least one grid step
        tile_s = (((S + 1) // 2) + 7) // 8 * 8
    return tile_s


def custom_embedding(sequence, weekday, hour, params, *, tile_s=None,
                     out_dtype=jnp.float32):
    B, S = sequence.shape
    d_model = params["w_lin"].shape[1]
    assert params["pos"].shape[0] >= S, "positional table shorter than sequence length"

    # ---- one-time host-side algebraic fusion of Linear(1,d_emb) @ Linear(d_emb,d_model) ----
    w_tok = params["w_tok"].reshape(-1)                  # (d_emb,)
    b_tok = params["b_tok"].reshape(-1)                  # (d_emb,)
    w_lin = params["w_lin"]                              # (d_emb, d_model)
    b_lin = params["b_lin"].reshape(-1)                  # (d_model,)
    w_eff = w_tok @ w_lin                                # (d_model,)
    b_eff = b_tok @ w_lin + b_lin                        # (d_model,)

    affine = jnp.zeros((8, d_model), jnp.float32)        # pad to 8 sublanes
    affine = (affine.at[0].set(w_eff)
                     .at[1].set(b_eff)
                     .at[2].set(params["gamma"].reshape(-1))
                     .at[3].set(params["beta"].reshape(-1)))

    # ---- fixed 128-row weekday+hour table (S-independent, VMEM-resident) ----
    W = 128
    table = jnp.zeros((W, d_model), jnp.float32)
    table = table.at[0:7].set(params["wd_tab"]).at[7:31].set(params["hr_tab"])

    pos = params["pos"][:S].astype(jnp.float32)          # (S, d_model), pipelined stream

    # ---- merged per-token input: one DMA per step instead of two ----
    packed = jnp.stack([sequence.astype(jnp.float32),
                        weekday.astype(jnp.float32),
                        hour.astype(jnp.float32) + 7.0], axis=-1)   # (B, S, 3)

    if tile_s is None:
        tile_s = _pick_tile_s(B, S)
    grid = (B, pl.cdiv(S, tile_s))

    # vmem limit sized from the actual (double-buffered) block footprint + headroom.
    bytes_per_set = 4 * (tile_s * 3                       # packed tile
                         + tile_s * d_model               # pos tile
                         + tile_s * d_model               # output tile
                         + 8 * d_model                    # affine rows
                         + W * d_model)                   # lookup table
    vmem_limit = int(min(64 << 20, 4 * bytes_per_set + (4 << 20)))

    out = pl.pallas_call(
        custom_embedding_kernel,
        out_shape=jax.ShapeDtypeStruct((B, S, d_model), out_dtype),
        grid=grid,
        in_specs=[
            pl.BlockSpec((1, tile_s, 3), lambda b, s: (b, s, 0)),       # packed tokens
            pl.BlockSpec((tile_s, d_model), lambda b, s: (s, 0)),       # positional stream
            pl.BlockSpec((8, d_model), lambda b, s: (0, 0)),            # affine (resident)
            pl.BlockSpec((W, d_model), lambda b, s: (0, 0)),            # wd+hr table (resident)
        ],
        out_specs=pl.BlockSpec((1, tile_s, d_model), lambda b, s: (b, s, 0)),
        compiler_params=pltpu.CompilerParams(
            dimension_semantics=("parallel", "parallel"),   # shards steps across v7x's 2 TCs
            vmem_limit_bytes=vmem_limit,
        ),
    )(packed, pos, affine, table)

    return out


def init_params(key, d_embedding, d_model, seq_len):
    ks = jax.random.split(key, 6)
    scale = 0.02
    return {
        # token: nn.Linear(1, d_embedding) -> weight (d_emb,), bias (d_emb,)
        "w_tok": scale * jax.random.normal(ks[0], (1, d_embedding), jnp.float32),
        "b_tok": scale * jax.random.normal(ks[1], (1, d_embedding), jnp.float32),
        # linear_layer: nn.Linear(d_embedding, d_model), stored as (in, out)
        "w_lin": scale * jax.random.normal(ks[2], (d_embedding, d_model), jnp.float32),
        "b_lin": scale * jax.random.normal(ks[3], (1, d_model), jnp.float32),
        # positional table (sinusoidal, fixed)
        "pos": make_sinusoidal_table(seq_len, d_model),
        # weekday / hour embedding tables (7 days, 24 hours)
        "wd_tab": scale * jax.random.normal(ks[4], (7, d_model), jnp.float32),
        "hr_tab": scale * jax.random.normal(ks[5], (24, d_model), jnp.float32),
        # LayerNorm affine params
        "gamma": jnp.ones((1, d_model), jnp.float32),
        "beta": jnp.zeros((1, d_model), jnp.float32),
    }


def reference(sequence, weekday, hour, params):
    """Pure-JAX reference matching the PyTorch forward."""
    S = sequence.shape[1]
    tok = sequence[..., None] * params["w_tok"].reshape(-1) + params["b_tok"].reshape(-1)
    x = tok @ params["w_lin"] + params["b_lin"].reshape(-1)
    x = x + params["pos"][:S][None, :, :]
    x = x + params["wd_tab"][weekday] + params["hr_tab"][hour]
    mean = x.mean(-1, keepdims=True)
    var = ((x - mean) ** 2).mean(-1, keepdims=True)
    xn = (x - mean) / jnp.sqrt(var + 1e-5)
    return xn * params["gamma"].reshape(-1) + params["beta"].reshape(-1)


if __name__ == "__main__":
    B, S = 4, 32
    d_embedding, d_model = 32, 128   # d_model=128 keeps the output block lane-dense

    key = jax.random.PRNGKey(0)
    k_seq, k_wd, k_hr, k_par = jax.random.split(key, 4)

    sequence = jax.random.normal(k_seq, (B, S), jnp.float32)
    weekday = jax.random.randint(k_wd, (B, S), 0, 7, jnp.int32)
    hour = jax.random.randint(k_hr, (B, S), 0, 24, jnp.int32)

    params = init_params(k_par, d_embedding, d_model, S)

    # Let the heuristic pick tile_s (full S here -> grid (B, 1) = 4 steps, >= 2 for v7x).
    out = custom_embedding(sequence, weekday, hour, params)
    jax.block_until_ready(out)
    assert out.shape == (B, S, d_model)

    ref = reference(sequence, weekday, hour, params)
    max_err = float(jnp.max(jnp.abs(out - ref)))
    assert max_err < 1e-4, f"mismatch vs reference: {max_err}"
    print("KERNEL_OK")
</pallas_src>

<mosaic_0001>
module attributes {stable_mosaic.version = 11 : i64} {
  func.func @custom_embedding_kernel(%arg0: i32, %arg1: i32, %arg2: memref<1x32x3xf32, #tpu.memory_space<vmem>>, %arg3: memref<32x128xf32, #tpu.memory_space<vmem>>, %arg4: memref<8x128xf32, #tpu.memory_space<vmem>>, %arg5: memref<128x128xf32, #tpu.memory_space<vmem>>, %arg6: memref<1x32x128xf32, #tpu.memory_space<vmem>>) attributes {dimension_semantics = [#tpu.dimension_semantics<parallel>, #tpu.dimension_semantics<parallel>], iteration_bounds = array<i64: 4, 1>, scalar_prefetch = 0 : i64, scratch_operands = 0 : i64, tpu.core_type = #tpu.core_type<tc>, window_params = [{transform_indices = @transform_0, window_bounds = array<i64: 1, 32, 3>}, {transform_indices = @transform_1, window_bounds = array<i64: 32, 128>}, {pipeline_mode = #tpu.pipeline_mode<synchronous>, transform_indices = @transform_2, window_bounds = array<i64: 8, 128>}, {pipeline_mode = #tpu.pipeline_mode<synchronous>, transform_indices = @transform_3, window_bounds = array<i64: 128, 128>}, {transform_indices = @transform_4, window_bounds = array<i64: 1, 32, 128>}]} {
    %c0 = arith.constant 0 : index
    %c0_0 = arith.constant 0 : index
    %c0_1 = arith.constant 0 : index
    %0 = vector.load %arg2[%c0, %c0_0, %c0_1] : memref<1x32x3xf32, #tpu.memory_space<vmem>>, vector<1x32x3xf32>
    %1 = vector.shape_cast %0 : vector<1x32x3xf32> to vector<32x3xf32>
    %2 = vector.extract_strided_slice %1 {offsets = [0, 0], sizes = [32, 1], strides = [1, 1]} : vector<32x3xf32> to vector<32x1xf32>
    %3 = vector.extract_strided_slice %1 {offsets = [0, 1], sizes = [32, 1], strides = [1, 1]} : vector<32x3xf32> to vector<32x1xf32>
    %4 = arith.fptosi %3 : vector<32x1xf32> to vector<32x1xi32>
    %5 = vector.extract_strided_slice %1 {offsets = [0, 2], sizes = [32, 1], strides = [1, 1]} : vector<32x3xf32> to vector<32x1xf32>
    %6 = arith.fptosi %5 : vector<32x1xf32> to vector<32x1xi32>
    %c0_2 = arith.constant 0 : index
    %c0_3 = arith.constant 0 : index
    %7 = vector.load %arg4[%c0_2, %c0_3] : memref<8x128xf32, #tpu.memory_space<vmem>>, vector<1x128xf32>
    %c1 = arith.constant 1 : index
    %c0_4 = arith.constant 0 : index
    %8 = vector.load %arg4[%c1, %c0_4] : memref<8x128xf32, #tpu.memory_space<vmem>>, vector<1x128xf32>
    %c2 = arith.constant 2 : index
    %c0_5 = arith.constant 0 : index
    %9 = vector.load %arg4[%c2, %c0_5] : memref<8x128xf32, #tpu.memory_space<vmem>>, vector<1x128xf32>
    %c3 = arith.constant 3 : index
    %c0_6 = arith.constant 0 : index
    %10 = vector.load %arg4[%c3, %c0_6] : memref<8x128xf32, #tpu.memory_space<vmem>>, vector<1x128xf32>
    %11 = vector.broadcast %2 : vector<32x1xf32> to vector<32x128xf32>
    %12 = vector.broadcast %7 : vector<1x128xf32> to vector<32x128xf32>
    %13 = arith.mulf %11, %12 : vector<32x128xf32>
    %14 = vector.broadcast %8 : vector<1x128xf32> to vector<32x128xf32>
    %15 = arith.addf %13, %14 : vector<32x128xf32>
    %16 = tpu.iota {dimensions = array<i32: 1>} : vector<32x128xi32>
    %17 = vector.broadcast %4 : vector<32x1xi32> to vector<32x128xi32>
    %18 = arith.cmpi eq, %16, %17 : vector<32x128xi32>
    %19 = vector.broadcast %6 : vector<32x1xi32> to vector<32x128xi32>
    %20 = arith.cmpi eq, %16, %19 : vector<32x128xi32>
    %21 = arith.ori %18, %20 : vector<32x128xi1>
    %22 = arith.extui %21 : vector<32x128xi1> to vector<32x128xi32>
    %23 = arith.sitofp %22 : vector<32x128xi32> to vector<32x128xf32>
    %c0_7 = arith.constant 0 : index
    %c0_8 = arith.constant 0 : index
    %24 = vector.load %arg5[%c0_7, %c0_8] : memref<128x128xf32, #tpu.memory_space<vmem>>, vector<128x128xf32>
    %cst = arith.constant dense<0.000000e+00> : vector<32x128xf32>
    %25 = tpu.matmul %23, %24, %cst {dimension_numbers = #tpu.dot_dimension_numbers<[1], [0], [0], [1], [0, 0, 1, 1], [], []>} : vector<32x128xf32>, vector<128x128xf32>, vector<32x128xf32> -> vector<32x128xf32>
    %26 = arith.addf %15, %25 : vector<32x128xf32>
    %c0_9 = arith.constant 0 : index
    %c0_10 = arith.constant 0 : index
    %27 = vector.load %arg3[%c0_9, %c0_10] : memref<32x128xf32, #tpu.memory_space<vmem>>, vector<32x128xf32>
    %28 = arith.addf %26, %27 : vector<32x128xf32>
    %cst_11 = arith.constant dense<0.000000e+00> : vector<32xf32>
    %29 = vector.multi_reduction <add>, %28, %cst_11 [1] : vector<32x128xf32> to vector<32xf32>
    %30 = vector.shape_cast %29 : vector<32xf32> to vector<32x1xf32>
    %cst_12 = arith.constant 1.280000e+02 : f32
    %31 = vector.broadcast %cst_12 : f32 to vector<32x1xf32>
    %32 = arith.divf %30, %31 : vector<32x1xf32>
    %33 = vector.broadcast %32 : vector<32x1xf32> to vector<32x128xf32>
    %34 = arith.subf %28, %33 : vector<32x128xf32>
    %35 = arith.mulf %34, %34 : vector<32x128xf32>
    %cst_13 = arith.constant dense<0.000000e+00> : vector<32xf32>
    %36 = vector.multi_reduction <add>, %35, %cst_13 [1] : vector<32x128xf32> to vector<32xf32>
    %37 = vector.shape_cast %36 : vector<32xf32> to vector<32x1xf32>
    %cst_14 = arith.constant 1.280000e+02 : f32
    %38 = vector.broadcast %cst_14 : f32 to vector<32x1xf32>
    %39 = arith.divf %37, %38 : vector<32x1xf32>
    %cst_15 = arith.constant 9.99999974E-6 : f32
    %40 = vector.broadcast %cst_15 : f32 to vector<32x1xf32>
    %41 = arith.addf %39, %40 : vector<32x1xf32>
    %42 = math.rsqrt %41 : vector<32x1xf32>
    %43 = vector.broadcast %42 : vector<32x1xf32> to vector<32x128xf32>
    %44 = arith.mulf %34, %43 : vector<32x128xf32>
    %45 = vector.broadcast %9 : vector<1x128xf32> to vector<32x128xf32>
    %46 = arith.mulf %44, %45 : vector<32x128xf32>
    %47 = vector.broadcast %10 : vector<1x128xf32> to vector<32x128xf32>
    %48 = arith.addf %46, %47 : vector<32x128xf32>
    %c0_16 = arith.constant 0 : index
    %c0_17 = arith.constant 0 : index
    %c0_18 = arith.constant 0 : index
    %49 = vector.load %arg6[%c0_16, %c0_17, %c0_18] : memref<1x32x128xf32, #tpu.memory_space<vmem>>, vector<1x32x128xf32>
    %50 = vector.shape_cast %49 : vector<1x32x128xf32> to vector<32x128xf32>
    %51 = vector.shape_cast %48 : vector<32x128xf32> to vector<1x32x128xf32>
    tpu.vector_store %arg6[%c0_16, %c0_17, %c0_18], %51 {strides = array<i32>} : memref<1x32x128xf32, #tpu.memory_space<vmem>>, vector<1x32x128xf32>,
    return
  }
  func.func @transform_0(%arg0: i32, %arg1: i32) -> (i32, i32, i32) {
    %c0_i32 = arith.constant 0 : i32
    %c0_i32_0 = arith.constant 0 : i32
    return %arg0, %arg1, %c0_i32 : i32, i32, i32
  }
  func.func @transform_1(%arg0: i32, %arg1: i32) -> (i32, i32) {
    %c0_i32 = arith.constant 0 : i32
    %c0_i32_0 = arith.constant 0 : i32
    return %arg1, %c0_i32 : i32, i32
  }
  func.func @transform_2(%arg0: i32, %arg1: i32) -> (i32, i32) {
    %c0_i32 = arith.constant 0 : i32
    %c0_i32_0 = arith.constant 0 : i32
    %c0_i32_1 = arith.constant 0 : i32
    return %c0_i32, %c0_i32_0 : i32, i32
  }
  func.func @transform_3(%arg0: i32, %arg1: i32) -> (i32, i32) {
    %c0_i32 = arith.constant 0 : i32
    %c0_i32_0 = arith.constant 0 : i32
    %c0_i32_1 = arith.constant 0 : i32
    return %c0_i32, %c0_i32_0 : i32, i32
  }
  func.func @transform_4(%arg0: i32, %arg1: i32) -> (i32, i32, i32) {
    %c0_i32 = arith.constant 0 : i32
    %c0_i32_0 = arith.constant 0 : i32
    return %arg0, %arg1, %c0_i32 : i32, i32, i32
  }
}

</mosaic_0001>

<llo_original>
// kernel: tpu_custom_call.1
$region0: #{tpu_custom_call.1}
  #allocation0 [shape = 'u32[]', space=smem, size = 0x4, offset = 0x4, fixed_abs, tag = 'smem constant byte address 0x4 - core index']
  #allocation1 [shape = 'u32[72,128]{1,0:T(1,128)}', space=vmem, size = 0x9000, scoped, tag = 'internal scratch']
  %s0 = inlined_call_operand.vmem [shape: f32[4,32,3], index: 0, kind: input, shape index: {}]
  %s1 = inlined_call_operand.hbm [shape: f32[32,128], index: 1, kind: input, shape index: {}]
  %s2 = inlined_call_operand.vmem [shape: f32[8,128], index: 2, kind: input, shape index: {}]
  %s3 = inlined_call_operand.vmem [shape: f32[128,128], index: 3, kind: input, shape index: {}]
  %s4 = inlined_call_operand.hbm [shape: f32[4,32,128], index: 4, kind: output, shape index: {}]
  %s5 = sld [smem:[#allocation0]]
  $region53: #{tpu_custom_call.1} parent=0
    _
  %s7 = ssub.s32 1, %s5
  %s8 = scalar_select 0, %s7, %s5
  $region1: #{tpu_custom_call.1} parent=0
    #allocation2 [shape = 'u8[16384]{0}', space=vmem, size = 0x4000, scoped, tag = 'input window, operand 1, single buffered']
    #allocation3 [shape = 's32[2]{0}', space=sflag, size = 0x8, scoped, tag = 'scoped memory for tpu_custom_call.1']
    #allocation4 [shape = 's32[2]{0}', space=sflag, size = 0x8, scoped, tag = 'scoped memory for tpu_custom_call.1']
    #allocation5 [shape = 'u8[32768]{0}', space=vmem, size = 0x8000, scoped, tag = 'output window, operand 0']
    %9 = vsyncpa [#allocation3], 0
    %10 = vsyncpa [#allocation4], 0
    %s11 = scalar_lea.sflag [#allocation4], 1
    %12 = vsyncpa %s11, 0
    loop: start=0, step=1, limit=6
    $region2: #{tpu_custom_call.1} parent=1 // loop_pre_header
      _
    $region3: #{tpu_custom_call.1} parent=1 // loop_header
      %s14 = sphi 0, %s18
      %p15 = scmp.ge.s32.totalorder %s14, 6
      %s21 = sphi 0, %s33
      %s22 = sphi 0, %s29
      %s23 = sphi 0, %s21
      %s24 = sphi 0, %s22
      %s25 = sphi 0, %s23
      %s26 = sphi 0, %s24
      %s38 = sphi 0, %s40
      %s41 = sphi 0, %s38
      %s42 = sphi 0, %s41
      %s58 = sphi 0, %s42
      %s64 = sphi 0, %s66
      %s67 = sphi 0, %s64
      %s68 = sphi 0, %s67
      %s84 = sphi 0, %s68
      %s88 = sphi 0, %s88
      %s90 = sphi 0, %s88
      %s91 = sphi 0, %s90
      %s105 = sphi 0, %s91
      %s109 = sphi 0, %s109
      %s111 = sphi 0, %s109
      %s112 = sphi 0, %s111
      %s126 = sphi 0, %s112
      %s134 = sphi 0, %s136
      %s137 = sphi 0, %s134
      %s138 = sphi 0, %s137
      %s154 = sphi 0, %s138
    $region4: #{tpu_custom_call.1} parent=1 // loop_header_branch
      %17 = sbr.rel (%p15) target = $region8
    $region5: #{tpu_custom_call.1} parent=1 // loop_body
      %s19 = ssub.s32 %s14, 1
      %s20 = ssub.s32 %s14, 2
      %s27 = sadd.s32 1, %s22
      %p28 = scmp.ge.s32.totalorder %s27, 1
      %s29 = scalar_select %p28, 0, %s27
      %s30 = sadd.s32 1, %s21
      %s31 = scalar_select %p28, %s30, %s21
      %p32 = scmp.ge.s32.totalorder %s31, 4
      %s33 = scalar_select %p32, 0, %s31
      %s34 = ssub.s32 %s21, %s33
      %s35 = ssub.s32 %s22, %s29
      %s36 = sor.u32 %s34, %s35
      %p37 = scmp.eq.s32.totalorder %s36, 0
      %s39 = sadd.s32 %s38, 1
      %s40 = scalar_select %p37, %s38, %s39
      %p43 = pneg %p37
      %p44 = scmp.eq.s32.totalorder %s14, 3
      %p45 = por %p43, %p44
      %p46 = scmp.ne.s32.totalorder %s38, %s41
      %p47 = scmp.eq.s32.totalorder %s14, 0
      %p48 = por %p46, %p47
      %p49 = scmp.ne.s32.totalorder %s38, %s41
      %p50 = scmp.eq.s32.totalorder %s19, 3
      %p51 = por %p49, %p50
      %p52 = scmp.ne.s32.totalorder %s41, %s42
      %p53 = scmp.eq.s32.totalorder %s19, 0
      %p54 = por %p52, %p53
      %p55 = scmp.ne.s32.totalorder %s41, %s42
      %p56 = scmp.eq.s32.totalorder %s20, 3
      %p57 = por %p55, %p56
      %p59 = scmp.ne.s32.totalorder %s42, %s58
      %p60 = scmp.eq.s32.totalorder %s20, 0
      %p61 = por %p59, %p60
      %s62 = ssub.s32 %s22, %s29
      %p63 = scmp.eq.s32.totalorder %s62, 0
      %s65 = sadd.s32 %s64, 1
      %s66 = scalar_select %p63, %s64, %s65
      %p69 = pneg %p63
      %p70 = scmp.eq.s32.totalorder %s14, 3
      %p71 = por %p69, %p70
      %p72 = scmp.ne.s32.totalorder %s64, %s67
      %p73 = scmp.eq.s32.totalorder %s14, 0
      %p74 = por %p72, %p73
      %p75 = scmp.ne.s32.totalorder %s64, %s67
      %p76 = scmp.eq.s32.totalorder %s19, 3
      %p77 = por %p75, %p76
      %p78 = scmp.ne.s32.totalorder %s67, %s68
      %p79 = scmp.eq.s32.totalorder %s19, 0
      %p80 = por %p78, %p79
      %p81 = scmp.ne.s32.totalorder %s67, %s68
      %p82 = scmp.eq.s32.totalorder %s20, 3
      %p83 = por %p81, %p82
      %p85 = scmp.ne.s32.totalorder %s68, %s84
      %p86 = scmp.eq.s32.totalorder %s20, 0
      %p87 = por %p85, %p86
      %s89 = sadd.s32 %s88, 1
      %p92 = scmp.eq.s32.totalorder %s14, 3
      %p93 = scmp.ne.s32.totalorder %s88, %s90
      %p94 = scmp.eq.s32.totalorder %s14, 0
      %p95 = por %p93, %p94
      %p96 = scmp.ne.s32.totalorder %s88, %s90
      %p97 = scmp.eq.s32.totalorder %s19, 3
      %p98 = por %p96, %p97
      %p99 = scmp.ne.s32.totalorder %s90, %s91
      %p100 = scmp.eq.s32.totalorder %s19, 0
      %p101 = por %p99, %p100
      %p102 = scmp.ne.s32.totalorder %s90, %s91
      %p103 = scmp.eq.s32.totalorder %s20, 3
      %p104 = por %p102, %p103
      %p106 = scmp.ne.s32.totalorder %s91, %s105
      %p107 = scmp.eq.s32.totalorder %s20, 0
      %p108 = por %p106, %p107
      %s110 = sadd.s32 %s109, 1
      %p113 = scmp.eq.s32.totalorder %s14, 3
      %p114 = scmp.ne.s32.totalorder %s109, %s111
      %p115 = scmp.eq.s32.totalorder %s14, 0
      %p116 = por %p114, %p115
      %p117 = scmp.ne.s32.totalorder %s109, %s111
      %p118 = scmp.eq.s32.totalorder %s19, 3
      %p119 = por %p117, %p118
      %p120 = scmp.ne.s32.totalorder %s111, %s112
      %p121 = scmp.eq.s32.totalorder %s19, 0
      %p122 = por %p120, %p121
      %p123 = scmp.ne.s32.totalorder %s111, %s112
      %p124 = scmp.eq.s32.totalorder %s20, 3
      %p125 = por %p123, %p124
      %p127 = scmp.ne.s32.totalorder %s112, %s126
      %p128 = scmp.eq.s32.totalorder %s20, 0
      %p129 = por %p127, %p128
      %s130 = ssub.s32 %s21, %s33
      %s131 = ssub.s32 %s22, %s29
      %s132 = sor.u32 %s130, %s131
      %p133 = scmp.eq.s32.totalorder %s132, 0
      %s135 = sadd.s32 %s134, 1
      %s136 = scalar_select %p133, %s134, %s135
      %p139 = pneg %p133
      %p140 = scmp.eq.s32.totalorder %s14, 3
      %p141 = por %p139, %p140
      %p142 = scmp.ne.s32.totalorder %s134, %s137
      %p143 = scmp.eq.s32.totalorder %s14, 0
      %p144 = por %p142, %p143
      %p145 = scmp.ne.s32.totalorder %s134, %s137
      %p146 = scmp.eq.s32.totalorder %s19, 3
      %p147 = por %p145, %p146
      %p148 = scmp.ne.s32.totalorder %s137, %s138
      %p149 = scmp.eq.s32.totalorder %s19, 0
      %p150 = por %p148, %p149
      %p151 = scmp.ne.s32.totalorder %s137, %s138
      %p152 = scmp.eq.s32.totalorder %s20, 3
      %p153 = por %p151, %p152
      %p155 = scmp.ne.s32.totalorder %s138, %s154
      %p156 = scmp.eq.s32.totalorder %s20, 0
      %p157 = por %p155, %p156
      %p158 = scmp.le.s32.totalorder 1, %s14
      %p159 = scmp.lt.s32.totalorder %s14, 5
      %p160 = pnand %p158, %p159
      %p161 = pneg %p160
      // Predicated region
      $region9: #{tpu_custom_call.1} parent=5 // pred_check
        _
      $region10: #{tpu_custom_call.1} parent=5 // pred_check_branch
        %163 = sbr.rel (%p160) target = $region12
      $region11: #{tpu_custom_call.1} parent=5 // pred_region
        %s164 = ssub.s32 %s14, 1
        // Predicated region
        $region13: #{tpu_custom_call.1} parent=11 // pred_check
          %p165 = pneg %p80
        $region14: #{tpu_custom_call.1} parent=11 // pred_check_branch
          %167 = sbr.rel (%p165) target = $region16
        $region15: #{tpu_custom_call.1} parent=11 // pred_region
          %s168 = smul.u32 4, %s24
          %170 = vsyncadd [#allocation3], 0
          %s171 = smul.addr %s168, 8
          %s172 = scalar_lea.hbm %s1, %s171
          %s173 = sshll.u32 %s172, 4
          %s174 = int_to_ptr.hbm [resolvable:$true] %s173
          %s175 = sshll.u32 [#allocation2], 4
          %s176 = int_to_ptr.vmem [resolvable:$true] %s175
          %181 = dma.hbm_to_vmem [thread:$0]  %s174, 512, %s176, [#allocation3], 128, 128, 8
        $region16: #{tpu_custom_call.1} parent=11 // pred_fallthru
          _
        // Predicated region
        $region17: #{tpu_custom_call.1} parent=11 // pred_check
          %p182 = pneg %p101
        $region18: #{tpu_custom_call.1} parent=11 // pred_check_branch
          %184 = sbr.rel (%p182) target = $region20
        $region19: #{tpu_custom_call.1} parent=11 // pred_region
          _
        $region20: #{tpu_custom_call.1} parent=11 // pred_fallthru
          _
        // Predicated region
        $region21: #{tpu_custom_call.1} parent=11 // pred_check
          %p185 = pneg %p122
        $region22: #{tpu_custom_call.1} parent=11 // pred_check_branch
          %187 = sbr.rel (%p185) target = $region24
        $region23: #{tpu_custom_call.1} parent=11 // pred_region
          _
        $region24: #{tpu_custom_call.1} parent=11 // pred_fallthru
          _
      $region12: #{tpu_custom_call.1} parent=5 // pred_fallthru
        _
      %p188 = scmp.lt.s32.totalorder %s14, 4
      // Predicated region
      $region25: #{tpu_custom_call.1} parent=5 // pred_check
        %p189 = pneg %p188
      $region26: #{tpu_custom_call.1} parent=5 // pred_check_branch
        %191 = sbr.rel (%p189) target = $region28
      $region27: #{tpu_custom_call.1} parent=5 // pred_region
        // Predicated region
        $region29: #{tpu_custom_call.1} parent=27 // pred_check
          %p192 = pneg %p48
        $region30: #{tpu_custom_call.1} parent=27 // pred_check_branch
          %194 = sbr.rel (%p192) target = $region32
        $region31: #{tpu_custom_call.1} parent=27 // pred_region
          %s195 = smul.u32 4, %s22
          %p196 = scmp.lt.s32.totalorder %s21, 3
          %s197 = scalar_select %p196, %s21, 3
          %p198 = scmp.lt.s32.totalorder %s195, 3
          %s199 = scalar_select %p198, %s195, 3
          %s200 = smul.addr %s197, 4
          %s201 = sadd.s32 %s199, %s200
          %s202 = smul.addr %s201, 8
          %s203 = scalar_lea.vmem %s0, %s202
          %s204 = smul.u32 4, %s22
        $region32: #{tpu_custom_call.1} parent=27 // pred_fallthru
          _
      $region28: #{tpu_custom_call.1} parent=5 // pred_fallthru
        _
      %p205 = scmp.le.s32.totalorder 1, %s14
      %p206 = scmp.lt.s32.totalorder %s14, 5
      %p207 = pnand %p205, %p206
      %p208 = pneg %p207
      // Predicated region
      $region33: #{tpu_custom_call.1} parent=5 // pred_check
        _
      $region34: #{tpu_custom_call.1} parent=5 // pred_check_branch
        %210 = sbr.rel (%p207) target = $region36
      $region35: #{tpu_custom_call.1} parent=5 // pred_region
        %s211 = ssub.s32 %s14, 1
        // Predicated region
        $region37: #{tpu_custom_call.1} parent=35 // pred_check
          %p212 = pneg %p80
        $region38: #{tpu_custom_call.1} parent=35 // pred_check_branch
          %214 = sbr.rel (%p212) target = $region40
        $region39: #{tpu_custom_call.1} parent=35 // pred_region
          %216 = dma.done [#allocation3], 512
        $region40: #{tpu_custom_call.1} parent=35 // pred_fallthru
          _
        %s217 = smul.u32 4, %s24
        %p218 = scmp.lt.s32.totalorder %s23, 3
        %s219 = scalar_select %p218, %s23, 3
        %p220 = scmp.lt.s32.totalorder %s217, 3
        %s221 = scalar_select %p220, %s217, 3
        %s222 = smul.addr %s219, 4
        %s223 = sadd.s32 %s221, %s222
        %s224 = smul.addr %s223, 8
        %s225 = scalar_lea.vmem %s0, %s224
        %p226 = pneg %p54
        %p227 = pneg %p51
        %p228 = pneg %p80
        %p229 = pneg %p77
        %p230 = pneg %p101
        %p231 = pneg %p98
        %p232 = pneg %p122
        %p233 = pneg %p119
        %p234 = pneg %p150
        %p235 = pneg %p147
        %s236 = sand.u32 %s137, 1
        %s237 = scalar_lea.sflag [#allocation4], %s236
        %s238 = sand.u32 %s137, 1
        %s239 = smul.addr %s238, 32
        %s240 = scalar_lea.vmem [#allocation5], %s239
        %s241 = smul.u32 4, %s24
        %p242 = scmp.lt.s32.totalorder %s23, 3
        %s243 = scalar_select %p242, %s23, 3
        %p244 = scmp.lt.s32.totalorder %s241, 3
        %s245 = scalar_select %p244, %s241, 3
        %s246 = smul.addr %s243, 4
        %s247 = sadd.s32 %s245, %s246
        %s248 = smul.addr %s247, 8
        %s249 = scalar_lea.vmem %s0, %s248
        %s250 = smul.u32 4, %s24
        %s251 = smul.u32 4, %s24
        %s252 = smul.u32 4, %s24
        %v253 = vld [vmem:[%s249] sm:$0xff]
        %v254 = vld [vmem:[%s249 + $0x8] sm:$0xff]
        %v255 = vld [vmem:[%s249 + $0x10] sm:$0xff]
        %v256 = vld [vmem:[%s249 + $0x18] sm:$0xff]
        %v257 = vcvt.f32.s32.to.zero.pseudo %v253
        %v258 = vcvt.f32.s32.to.zero.pseudo %v254
        %v259 = vcvt.f32.s32.to.zero.pseudo %v255
        %v260 = vcvt.f32.s32.to.zero.pseudo %v256
        %v261 = vld [vmem:[%s2] sm:$0x1]
        %v262 = vld [vmem:[%s2 + $0x1] sm:$0x1]
        %v263 = vld [vmem:[%s2 + $0x2] sm:$0x1]
        %v264 = vld [vmem:[%s2 + $0x3] sm:$0x1]
        %266 = vset.pattern.permute.xlu0 0
        %267 = vperm.xlu0 %266, %v253
        %v268 = vpop.permute.xlu0 %267
        %271 = vset.pattern.permute.xlu0 0
        %272 = vperm.xlu0 %271, %v254
        %v273 = vpop.permute.xlu0 %272
        %276 = vset.pattern.permute.xlu0 0
        %277 = vperm.xlu0 %276, %v255
        %v278 = vpop.permute.xlu0 %277
        %281 = vset.pattern.permute.xlu0 0
        %282 = vperm.xlu0 %281, %v256
        %v283 = vpop.permute.xlu0 %282
        %v285 = vperm.slane %v261, 0
        %v286 = vmul.f32 %v268, %v285
        %v287 = vmul.f32 %v273, %v285
        %v288 = vmul.f32 %v278, %v285
        %v289 = vmul.f32 %v283, %v285
        %v290 = vperm.slane %v262, 0
        %v291 = vadd.f32 %v286, %v290
        %v292 = vadd.f32 %v287, %v290
        %v293 = vadd.f32 %v288, %v290
        %v294 = vadd.f32 %v289, %v290
        %v295 = vlaneseq
        %v296 = vand.u32 %v295, 127
        %297 = vset.pattern.permute.xlu0 1
        %298 = vperm.xlu0 %297, %v257
        %v299 = vpop.permute.xlu0 %298
        %300 = vset.pattern.permute.xlu0 1
        %301 = vperm.xlu0 %300, %v258
        %v302 = vpop.permute.xlu0 %301
        %303 = vset.pattern.permute.xlu0 1
        %304 = vperm.xlu0 %303, %v259
        %v305 = vpop.permute.xlu0 %304
        %306 = vset.pattern.permute.xlu0 1
        %307 = vperm.xlu0 %306, %v260
        %v308 = vpop.permute.xlu0 %307
        %vm309 = vcmp.eq.s32.totalorder %v296, %v299
        %vm310 = vcmp.eq.s32.totalorder %v296, %v302
        %vm311 = vcmp.eq.s32.totalorder %v296, %v305
        %vm312 = vcmp.eq.s32.totalorder %v296, %v308
        %313 = vset.pattern.permute.xlu0 2
        %314 = vperm.xlu0 %313, %v257
        %v315 = vpop.permute.xlu0 %314
        %316 = vset.pattern.permute.xlu0 2
        %317 = vperm.xlu0 %316, %v258
        %v318 = vpop.permute.xlu0 %317
        %319 = vset.pattern.permute.xlu0 2
        %320 = vperm.xlu0 %319, %v259
        %v321 = vpop.permute.xlu0 %320
        %322 = vset.pattern.permute.xlu0 2
        %323 = vperm.xlu0 %322, %v260
        %v324 = vpop.permute.xlu0 %323
        %vm325 = vcmp.eq.s32.totalorder %v296, %v315
        %vm326 = vcmp.eq.s32.totalorder %v296, %v318
        %vm327 = vcmp.eq.s32.totalorder %v296, %v321
        %vm328 = vcmp.eq.s32.totalorder %v296, %v324
        %vm329 = vmor %vm309, %vm325
        %vm330 = vmor %vm310, %vm326
        %vm331 = vmor %vm311, %vm327
        %vm332 = vmor %vm312, %vm328
        %v333 = vsel %vm329, 1, 0
        %v334 = vsel %vm330, 1, 0
        %v335 = vsel %vm331, 1, 0
        %v336 = vsel %vm332, 1, 0
        %v337 = vcvt.s32.f32 %v333
        %v338 = vcvt.s32.f32 %v334
        %v339 = vcvt.s32.f32 %v335
        %v340 = vcvt.s32.f32 %v336
        %v341 = vld [vmem:[%s3] sm:$0xff]
        %v342 = vld [vmem:[%s3 + $0x8] sm:$0xff]
        %v343 = vld [vmem:[%s3 + $0x10] sm:$0xff]
        %v344 = vld [vmem:[%s3 + $0x18] sm:$0xff]
        %v345 = vld [vmem:[%s3 + $0x20] sm:$0xff]
        %v346 = vld [vmem:[%s3 + $0x28] sm:$0xff]
        %v347 = vld [vmem:[%s3 + $0x30] sm:$0xff]
        %v348 = vld [vmem:[%s3 + $0x38] sm:$0xff]
        %v349 = vld [vmem:[%s3 + $0x40] sm:$0xff]
        %v350 = vld [vmem:[%s3 + $0x48] sm:$0xff]
        %v351 = vld [vmem:[%s3 + $0x50] sm:$0xff]
        %v352 = vld [vmem:[%s3 + $0x58] sm:$0xff]
        %v353 = vld [vmem:[%s3 + $0x60] sm:$0xff]
        %v354 = vld [vmem:[%s3 + $0x68] sm:$0xff]
        %v355 = vld [vmem:[%s3 + $0x70] sm:$0xff]
        %v356 = vld [vmem:[%s3 + $0x78] sm:$0xff]
        %357 = vmatpush.msra.mxu0 %v356
        %358 = vmatpush.msra.mxu0 %v355
        %359 = vmatpush.msra.mxu0 %v354
        %360 = vmatpush.msra.mxu0 %v353
        %361 = vmatpush.msra.mxu0 %v352
        %362 = vmatpush.msra.mxu0 %v351
        %363 = vmatpush.msra.mxu0 %v350
        %364 = vmatpush.msra.mxu0 %v349
        %365 = vmatpush.msra.mxu0 %v348
        %366 = vmatpush.msra.mxu0 %v347
        %367 = vmatpush.msra.mxu0 %v346
        %368 = vmatpush.msra.mxu0 %v345
        %369 = vmatpush.msra.mxu0 %v344
        %370 = vmatpush.msra.mxu0 %v343
        %371 = vmatpush.msra.mxu0 %v342
        %372 = vmatpush.msra.mxu0 %v341
        %373 = vmatmul.f32.gmra.mxu0 %v337
        %v374 = vpop.f32.mrf.mxu0
        %v375 = vadd.f32 0.0, %v374
        %376 = vmatmul.f32.gmra.mxu0 %v338
        %v377 = vpop.f32.mrf.mxu0
        %v378 = vadd.f32 0.0, %v377
        %379 = vmatmul.f32.gmra.mxu0 %v339
        %v380 = vpop.f32.mrf.mxu0
        %v381 = vadd.f32 0.0, %v380
        %382 = vmatmul.f32.gmra.mxu0 %v340
        %v383 = vpop.f32.mrf.mxu0
        %v384 = vadd.f32 0.0, %v383
        %385 = vdwg.mxu0
        %v386 = vadd.f32 %v291, %v375
        %v387 = vadd.f32 %v292, %v378
        %v388 = vadd.f32 %v293, %v381
        %v389 = vadd.f32 %v294, %v384
        %v390 = vld [vmem:[#allocation2] sm:$0xff]
        %v391 = vld [vmem:[#allocation2 + $0x8] sm:$0xff]
        %v392 = vld [vmem:[#allocation2 + $0x10] sm:$0xff]
        %v393 = vld [vmem:[#allocation2 + $0x18] sm:$0xff]
        %v394 = vadd.f32 %v386, %v390
        %v395 = vadd.f32 %v387, %v391
        %v396 = vadd.f32 %v388, %v392
        %v397 = vadd.f32 %v389, %v393
        %398 = vadd.xlane.f32.xlu0 %v394
        %v399 = vpop.xlane.xlu0 %398
        %400 = vadd.xlane.f32.xlu0 %v395
        %v401 = vpop.xlane.xlu0 %400
        %402 = vadd.xlane.f32.xlu0 %v396
        %v403 = vpop.xlane.xlu0 %402
        %404 = vadd.xlane.f32.xlu0 %v397
        %v405 = vpop.xlane.xlu0 %404
        %v406 = vrcp.pop 128.0
        %v407 = vmul.f32 128.0, %v406
        %v408 = vsub.f32 1.0, %v407
        %v409 = vmul.f32 %v406, %v408
        %v410 = vadd.f32 %v406, %v409
        %vm411 = vweird.f32 %v406
        %v412 = vsel %vm411, %v406, %v410
        %v413 = vmul.f32 %v399, %v412
        %v414 = vmul.f32 %v401, %v412
        %v415 = vmul.f32 %v403, %v412
        %v416 = vmul.f32 %v405, %v412
        %v417 = vsub.f32 %v394, %v413
        %v418 = vsub.f32 %v395, %v414
        %v419 = vsub.f32 %v396, %v415
        %v420 = vsub.f32 %v397, %v416
        %v421 = vmul.f32 %v417, %v417
        %v422 = vmul.f32 %v418, %v418
        %v423 = vmul.f32 %v419, %v419
        %v424 = vmul.f32 %v420, %v420
        %425 = vadd.xlane.f32.xlu0 %v421
        %v426 = vpop.xlane.xlu0 %425
        %427 = vadd.xlane.f32.xlu0 %v422
        %v428 = vpop.xlane.xlu0 %427
        %429 = vadd.xlane.f32.xlu0 %v423
        %v430 = vpop.xlane.xlu0 %429
        %431 = vadd.xlane.f32.xlu0 %v424
        %v432 = vpop.xlane.xlu0 %431
        %v433 = vmul.f32 %v426, %v412
        %v434 = vmul.f32 %v428, %v412
        %v435 = vmul.f32 %v430, %v412
        %v436 = vmul.f32 %v432, %v412
        %v437 = vadd.f32 %v433, 1e-05
        %v438 = vadd.f32 %v434, 1e-05
        %v439 = vadd.f32 %v435, 1e-05
        %v440 = vadd.f32 %v436, 1e-05
        %v441 = vrsqrt.pop %v437
        %v442 = vmul.f32 %v441, %v437
        %v443 = vmul.f32 %v442, %v441
        %v444 = vmul.f32 0.5, %v443
        %v445 = vsub.f32 1.5, %v444
        %v446 = vmul.f32 %v441, %v445
        %vm447 = vweird.f32 %v437
        %vm448 = vweird.f32 %v441
        %vm449 = vmor %vm447, %vm448
        %v450 = vsel %vm449, %v441, %v446
        %v451 = vrsqrt.pop %v438
        %v452 = vmul.f32 %v451, %v438
        %v453 = vmul.f32 %v452, %v451
        %v454 = vmul.f32 0.5, %v453
        %v455 = vsub.f32 1.5, %v454
        %v456 = vmul.f32 %v451, %v455
        %vm457 = vweird.f32 %v438
        %vm458 = vweird.f32 %v451
        %vm459 = vmor %vm457, %vm458
        %v460 = vsel %vm459, %v451, %v456
        %v461 = vrsqrt.pop %v439
        %v462 = vmul.f32 %v461, %v439
        %v463 = vmul.f32 %v462, %v461
        %v464 = vmul.f32 0.5, %v463
        %v465 = vsub.f32 1.5, %v464
        %v466 = vmul.f32 %v461, %v465
        %vm467 = vweird.f32 %v439
        %vm468 = vweird.f32 %v461
        %vm469 = vmor %vm467, %vm468
        %v470 = vsel %vm469, %v461, %v466
        %v471 = vrsqrt.pop %v440
        %v472 = vmul.f32 %v471, %v440
        %v473 = vmul.f32 %v472, %v471
        %v474 = vmul.f32 0.5, %v473
        %v475 = vsub.f32 1.5, %v474
        %v476 = vmul.f32 %v471, %v475
        %vm477 = vweird.f32 %v440
        %vm478 = vweird.f32 %v471
        %vm479 = vmor %vm477, %vm478
        %v480 = vsel %vm479, %v471, %v476
        %v481 = vmul.f32 %v417, %v450
        %v482 = vmul.f32 %v418, %v460
        %v483 = vmul.f32 %v419, %v470
        %v484 = vmul.f32 %v420, %v480
        %v485 = vperm.slane %v263, 0
        %v486 = vmul.f32 %v481, %v485
        %v487 = vmul.f32 %v482, %v485
        %v488 = vmul.f32 %v483, %v485
        %v489 = vmul.f32 %v484, %v485
        %v490 = vperm.slane %v264, 0
        %v491 = vadd.f32 %v486, %v490
        %v492 = vadd.f32 %v487, %v490
        %v493 = vadd.f32 %v488, %v490
        %v494 = vadd.f32 %v489, %v490
        %495 = vst [vmem:[%s240] sm:$0xff] %v491
        %496 = vst [vmem:[%s240 + $0x8] sm:$0xff] %v492
        %497 = vst [vmem:[%s240 + $0x10] sm:$0xff] %v493
        %498 = vst [vmem:[%s240 + $0x18] sm:$0xff] %v494
        %s499 = sand.u32 %s137, 1
        %s500 = scalar_lea.sflag [#allocation4], %s499
        %s501 = sand.u32 %s137, 1
        %s502 = smul.addr %s501, 32
        %s503 = scalar_lea.vmem [#allocation5], %s502
        // Predicated region
        $region41: #{tpu_custom_call.1} parent=35 // pred_check
          %p504 = pneg %p147
        $region42: #{tpu_custom_call.1} parent=35 // pred_check_branch
          %506 = sbr.rel (%p504) target = $region44
        $region43: #{tpu_custom_call.1} parent=35 // pred_region
          %s507 = smul.u32 4, %s24
          %509 = vsyncadd %s500, 0
          %s510 = smul.addr %s23, 4
          %s511 = sadd.s32 %s507, %s510
          %s512 = smul.addr %s511, 8
          %s513 = scalar_lea.hbm %s4, %s512
          %s514 = sshll.u32 %s503, 4
          %s515 = int_to_ptr.vmem [resolvable:$true] %s514
          %s516 = sshll.u32 %s513, 4
          %s517 = int_to_ptr.hbm [resolvable:$true] %s516
          %522 = dma.vmem_to_hbm [thread:$0]  %s515, 512, %s517, %s500, 128, 128, 8
        $region44: #{tpu_custom_call.1} parent=35 // pred_fallthru
          _
      $region36: #{tpu_custom_call.1} parent=5 // pred_fallthru
        _
      %p523 = scmp.le.s32.totalorder 2, %s14
      // Predicated region
      $region45: #{tpu_custom_call.1} parent=5 // pred_check
        %p524 = pneg %p523
      $region46: #{tpu_custom_call.1} parent=5 // pred_check_branch
        %526 = sbr.rel (%p524) target = $region48
      $region47: #{tpu_custom_call.1} parent=5 // pred_region
        %s527 = ssub.s32 %s14, 2
        // Predicated region
        $region49: #{tpu_custom_call.1} parent=47 // pred_check
          %p528 = pneg %p153
        $region50: #{tpu_custom_call.1} parent=47 // pred_check_branch
          %530 = sbr.rel (%p528) target = $region52
        $region51: #{tpu_custom_call.1} parent=47 // pred_region
          %s531 = sand.u32 %s138, 1
          %s532 = scalar_lea.sflag [#allocation4], %s531
          %s533 = sand.u32 %s138, 1
          %s534 = smul.addr %s533, 32
          %s535 = scalar_lea.vmem [#allocation5], %s534
          %537 = dma.done %s532, 512
        $region52: #{tpu_custom_call.1} parent=47 // pred_fallthru
          _
      $region48: #{tpu_custom_call.1} parent=5 // pred_fallthru
        _
    $region6: #{tpu_custom_call.1} parent=1 // loop_footer
      %s18 = sadd.s32 1, %s14
    $region7: #{tpu_custom_call.1} parent=1 // loop_footer_branch
      %13 = sbr.rel target = $region3
    $region8: #{tpu_custom_call.1} parent=1 // loop_exit
      _
    %538 = vsyncpa [#allocation3], 1
    %s539 = scalar_lea.sflag [#allocation3], 1
    %540 = vsyncpa %s539, 1
    %541 = vsyncpa [#allocation4], 1
    %s542 = scalar_lea.sflag [#allocation4], 1
    %543 = vsyncpa %s542, 1

</llo_original>
